<compile_context>
chip_gen: v6e
topology: v6e:2x2x1
jax: 0.10.0
libtpu: 0.0.40
codegen_flags: <defaults>
</compile_context>

<pallas_src>
import functools

import jax
import jax.numpy as jnp
from jax.experimental import pallas as pl
from jax.experimental.pallas import tpu as pltpu


def _mlp_set_kernel(x1_ref, x2_ref, w1t_ref, b1_ref, w2t_ref, b2_ref, out_ref):
    # square(x1 - x2): elementwise on the VPU, (B, E)
    d = x1_ref[...] - x2_ref[...]
    d = d * d

    # fc1: (B, E) @ (E, H) + b1, then ReLU. Dropout is identity (eval mode).
    h = jnp.dot(d, w1t_ref[...], preferred_element_type=jnp.float32) + b1_ref[...]
    h = jnp.maximum(h, 0.0)

    # fc2: (B, H) @ (H, 1) + b2 (scalar from SMEM), then sigmoid.
    logit = jnp.dot(h, w2t_ref[...], preferred_element_type=jnp.float32) + b2_ref[0, 0]
    out_ref[...] = jax.nn.sigmoid(logit).astype(out_ref.dtype)


@jax.jit
def mlp_set(x, W1, b1, W2, b2):
    """x: (B, 2, E); W1: (H, E); b1: (H,); W2: (1, H); b2: (1,). Returns (B, 1)."""
    B, two, E = x.shape
    assert two == 2
    H = W1.shape[0]

    x1 = x[:, 0, :].astype(jnp.float32)
    x2 = x[:, 1, :].astype(jnp.float32)
    w1t = jnp.transpose(W1).astype(jnp.float32)   # (E, H)
    b1r = b1.reshape(1, H).astype(jnp.float32)    # resident bias row
    w2t = jnp.transpose(W2).astype(jnp.float32)   # (H, 1)
    b2r = b2.reshape(1, 1).astype(jnp.float32)    # scalar -> SMEM

    return pl.pallas_call(
        _mlp_set_kernel,
        out_shape=jax.ShapeDtypeStruct((B, 1), jnp.float32),
        in_specs=[
            pl.BlockSpec(memory_space=pltpu.MemorySpace.VMEM),   # x1
            pl.BlockSpec(memory_space=pltpu.MemorySpace.VMEM),   # x2
            pl.BlockSpec(memory_space=pltpu.MemorySpace.VMEM),   # W1^T (E, H)
            pl.BlockSpec(memory_space=pltpu.MemorySpace.VMEM),   # b1   (1, H)
            pl.BlockSpec(memory_space=pltpu.MemorySpace.VMEM),   # W2^T (H, 1)
            pl.BlockSpec(memory_space=pltpu.MemorySpace.SMEM),   # b2   (1, 1) scalar
        ],
        out_specs=pl.BlockSpec(memory_space=pltpu.MemorySpace.VMEM),
    )(x1, x2, w1t, b1r, w2t, b2r)


def _reference(x, W1, b1, W2, b2):
    d = jnp.square(x[:, 0, :] - x[:, 1, :])
    h = jnp.maximum(d @ W1.T + b1, 0.0)       # ReLU (dropout = identity, eval mode)
    logit = h @ W2.T + b2
    return jax.nn.sigmoid(logit)


if __name__ == "__main__":
    EMB_DIM = 32
    HIDDEN = 100
    B = 8

    key = jax.random.PRNGKey(0)
    kx, kw1, kb1, kw2, kb2 = jax.random.split(key, 5)

    # Deterministic parameter init (mimics PyTorch Linear uniform(-1/sqrt(fan_in), 1/sqrt(fan_in))).
    bound1 = 1.0 / jnp.sqrt(EMB_DIM)
    W1 = jax.random.uniform(kw1, (HIDDEN, EMB_DIM), jnp.float32, -bound1, bound1)
    b1 = jax.random.uniform(kb1, (HIDDEN,), jnp.float32, -bound1, bound1)
    bound2 = 1.0 / jnp.sqrt(HIDDEN)
    W2 = jax.random.uniform(kw2, (1, HIDDEN), jnp.float32, -bound2, bound2)
    b2 = jax.random.uniform(kb2, (1,), jnp.float32, -bound2, bound2)

    x = jax.random.normal(kx, (B, 2, EMB_DIM), jnp.float32)

    out = mlp_set(x, W1, b1, W2, b2)
    out = jax.block_until_ready(out)

    ref = _reference(x, W1, b1, W2, b2)
    assert out.shape == (B, 1)
    assert jnp.allclose(out, ref, atol=1e-5, rtol=1e-5), (out, ref)

    print("KERNEL_OK")
</pallas_src>

<mosaic_0001>
module attributes {stable_mosaic.version = 11 : i64} {
  func.func @_mlp_set_kernel(%arg0: memref<8x32xf32, #tpu.memory_space<vmem>>, %arg1: memref<8x32xf32, #tpu.memory_space<vmem>>, %arg2: memref<32x100xf32, #tpu.memory_space<vmem>>, %arg3: memref<1x100xf32, #tpu.memory_space<vmem>>, %arg4: memref<100x1xf32, #tpu.memory_space<vmem>>, %arg5: memref<1x1xf32, #tpu.memory_space<smem>>, %arg6: memref<8x1xf32, #tpu.memory_space<vmem>>) attributes {dimension_semantics = [], scalar_prefetch = 0 : i64, scratch_operands = 0 : i64, tpu.core_type = #tpu.core_type<tc>} {
    %c0 = arith.constant 0 : index
    %c0_0 = arith.constant 0 : index
    %0 = vector.load %arg0[%c0, %c0_0] : memref<8x32xf32, #tpu.memory_space<vmem>>, vector<8x32xf32>
    %c0_1 = arith.constant 0 : index
    %c0_2 = arith.constant 0 : index
    %1 = vector.load %arg1[%c0_1, %c0_2] : memref<8x32xf32, #tpu.memory_space<vmem>>, vector<8x32xf32>
    %2 = arith.subf %0, %1 : vector<8x32xf32>
    %3 = arith.mulf %2, %2 : vector<8x32xf32>
    %c0_3 = arith.constant 0 : index
    %c0_4 = arith.constant 0 : index
    %4 = vector.load %arg2[%c0_3, %c0_4] : memref<32x100xf32, #tpu.memory_space<vmem>>, vector<32x100xf32>
    %cst = arith.constant dense<0.000000e+00> : vector<8x100xf32>
    %5 = tpu.matmul %3, %4, %cst {dimension_numbers = #tpu.dot_dimension_numbers<[1], [0], [0], [1], [0, 0, 1, 1], [], []>} : vector<8x32xf32>, vector<32x100xf32>, vector<8x100xf32> -> vector<8x100xf32>
    %c0_5 = arith.constant 0 : index
    %c0_6 = arith.constant 0 : index
    %6 = vector.load %arg3[%c0_5, %c0_6] : memref<1x100xf32, #tpu.memory_space<vmem>>, vector<1x100xf32>
    %7 = vector.broadcast %6 : vector<1x100xf32> to vector<8x100xf32>
    %8 = arith.addf %5, %7 : vector<8x100xf32>
    %cst_7 = arith.constant 0.000000e+00 : f32
    %9 = vector.broadcast %cst_7 : f32 to vector<8x100xf32>
    %10 = arith.maximumf %8, %9 : vector<8x100xf32>
    %c0_8 = arith.constant 0 : index
    %c0_9 = arith.constant 0 : index
    %11 = vector.load %arg4[%c0_8, %c0_9] : memref<100x1xf32, #tpu.memory_space<vmem>>, vector<100x1xf32>
    %cst_10 = arith.constant dense<0.000000e+00> : vector<8x1xf32>
    %12 = tpu.matmul %10, %11, %cst_10 {dimension_numbers = #tpu.dot_dimension_numbers<[1], [0], [0], [1], [0, 0, 1, 1], [], []>} : vector<8x100xf32>, vector<100x1xf32>, vector<8x1xf32> -> vector<8x1xf32>
    %c0_11 = arith.constant 0 : index
    %c0_12 = arith.constant 0 : index
    %13 = memref.load %arg5[%c0_11, %c0_12] : memref<1x1xf32, #tpu.memory_space<smem>>
    %14 = vector.broadcast %13 : f32 to vector<8x1xf32>
    %15 = arith.addf %12, %14 : vector<8x1xf32>
    %16 = arith.negf %15 : vector<8x1xf32>
    %17 = math.exp %16 : vector<8x1xf32>
    %cst_13 = arith.constant 1.000000e+00 : f32
    %18 = vector.broadcast %cst_13 : f32 to vector<8x1xf32>
    %19 = arith.addf %18, %17 : vector<8x1xf32>
    %20 = arith.divf %18, %19 : vector<8x1xf32>
    %c0_14 = arith.constant 0 : index
    %c0_15 = arith.constant 0 : index
    %21 = vector.load %arg6[%c0_14, %c0_15] : memref<8x1xf32, #tpu.memory_space<vmem>>, vector<8x1xf32>
    tpu.vector_store %arg6[%c0_14, %c0_15], %20 {strides = array<i32>} : memref<8x1xf32, #tpu.memory_space<vmem>>, vector<8x1xf32>,
    return
  }
}

</mosaic_0001>

<llo_original>
// kernel: mlp_set.1
$region0: #{mlp_set.1}
  #allocation0 [shape = 'u32[]', space=smem, size = 0x4, offset = 0x4, fixed_abs, tag = 'smem constant byte address 0x4 - core index']
  #allocation1 [shape = 'u32[144,128]{1,0:T(1,128)}', space=vmem, size = 0x12000, scoped, tag = 'internal scratch']
  #allocation2 [shape = 'f32[1,1]{1,0:T(1,128)S(6)}', space=smem, size = 0x200, scoped, tag = 'scoped memory for mlp_set.1']
  %s0 = inlined_call_operand.vmem [shape: f32[8,32], index: 0, kind: input, shape index: {}]
  %s1 = inlined_call_operand.vmem [shape: f32[8,32], index: 1, kind: input, shape index: {}]
  %s2 = inlined_call_operand.vmem [shape: f32[32,100], index: 2, kind: input, shape index: {}]
  %s3 = inlined_call_operand.vmem [shape: f32[1,100], index: 3, kind: input, shape index: {}]
  %s4 = inlined_call_operand.vmem [shape: f32[100,1], index: 4, kind: input, shape index: {}]
  %s5 = inlined_call_operand.<no memory space> [shape: f32[1,1], index: 5, kind: input, shape index: {}]
  %s6 = inlined_call_operand.vmem [shape: f32[8,1], index: 6, kind: output, shape index: {}]
  %s7 = sld [smem:[#allocation0]]
  $region34: #{mlp_set.1} parent=0
    _
  %s9 = ssub.s32 1, %s7
  %s10 = scalar_select 0, %s9, %s7
  %11 = sst [smem:[#allocation2]] %s5
  // Predicated region
  $region2: #{mlp_set.1} parent=0 // pred_check
    _
  $region3: #{mlp_set.1} parent=0 // pred_check_branch
    %13 = sbr.rel (0) target = $region5
  $region4: #{mlp_set.1} parent=0 // pred_region
    _
  $region5: #{mlp_set.1} parent=0 // pred_fallthru
    _
  // Predicated region
  $region6: #{mlp_set.1} parent=0 // pred_check
    _
  $region7: #{mlp_set.1} parent=0 // pred_check_branch
    %15 = sbr.rel (0) target = $region9
  $region8: #{mlp_set.1} parent=0 // pred_region
    _
  $region9: #{mlp_set.1} parent=0 // pred_fallthru
    _
  // Predicated region
  $region10: #{mlp_set.1} parent=0 // pred_check
    _
  $region11: #{mlp_set.1} parent=0 // pred_check_branch
    %17 = sbr.rel (0) target = $region13
  $region12: #{mlp_set.1} parent=0 // pred_region
    _
  $region13: #{mlp_set.1} parent=0 // pred_fallthru
    _
  // Predicated region
  $region14: #{mlp_set.1} parent=0 // pred_check
    _
  $region15: #{mlp_set.1} parent=0 // pred_check_branch
    %19 = sbr.rel (0) target = $region17
  $region16: #{mlp_set.1} parent=0 // pred_region
    _
  $region17: #{mlp_set.1} parent=0 // pred_fallthru
    _
  // Predicated region
  $region18: #{mlp_set.1} parent=0 // pred_check
    _
  $region19: #{mlp_set.1} parent=0 // pred_check_branch
    %21 = sbr.rel (0) target = $region21
  $region20: #{mlp_set.1} parent=0 // pred_region
    _
  $region21: #{mlp_set.1} parent=0 // pred_fallthru
    _
  // Predicated region
  $region22: #{mlp_set.1} parent=0 // pred_check
    _
  $region23: #{mlp_set.1} parent=0 // pred_check_branch
    %23 = sbr.rel (0) target = $region25
  $region24: #{mlp_set.1} parent=0 // pred_region
    _
  $region25: #{mlp_set.1} parent=0 // pred_fallthru
    _
  %v24 = vld [vmem:[%s0] sm:$0xff]
  %v25 = vld [vmem:[%s1] sm:$0xff]
  %v26 = vsub.f32 %v24, %v25
  %v27 = vmul.f32 %v26, %v26
  %v28 = vld [vmem:[%s2] sm:$0xff]
  %v29 = vld [vmem:[%s2 + $0x8] sm:$0xff]
  %v30 = vld [vmem:[%s2 + $0x10] sm:$0xff]
  %v31 = vld [vmem:[%s2 + $0x18] sm:$0xff]
  %v32 = vld [vmem:[%s3] sm:$0x1]
  %v34 = vlaneseq
  %v35 = vshrl.u32 %v34, 7
  %v36 = vsub.s32 0, %v35
  %v37 = vrot.slane %v32, %v36
  %vm39 = vcmask 261120
  %v41 = vsel %vm39, %v27, 0
  %43 = vmatprep.subr.mxu0 0.0
  %44 = vmatpush1.msra.mxu0 0.0
  %45 = vmatprep.subr.mxu0 0.0
  %46 = vmatpush1.msra.mxu0 0.0
  %47 = vmatprep.subr.mxu0 0.0
  %48 = vmatpush1.msra.mxu0 0.0
  %49 = vmatprep.subr.mxu0 0.0
  %50 = vmatpush1.msra.mxu0 0.0
  %51 = vmatprep.subr.mxu0 0.0
  %52 = vmatpush1.msra.mxu0 0.0
  %53 = vmatprep.subr.mxu0 0.0
  %54 = vmatpush1.msra.mxu0 0.0
  %55 = vmatprep.subr.mxu0 0.0
  %56 = vmatpush1.msra.mxu0 0.0
  %57 = vmatprep.subr.mxu0 0.0
  %58 = vmatpush1.msra.mxu0 0.0
  %59 = vmatprep.subr.mxu0 0.0
  %60 = vmatpush1.msra.mxu0 0.0
  %61 = vmatprep.subr.mxu0 0.0
  %62 = vmatpush1.msra.mxu0 0.0
  %63 = vmatprep.subr.mxu0 0.0
  %64 = vmatpush1.msra.mxu0 0.0
  %65 = vmatprep.subr.mxu0 0.0
  %66 = vmatpush1.msra.mxu0 0.0
  %67 = vmatprep.subr.mxu0 0.0
  %68 = vmatpush1.msra.mxu0 %v31
  %69 = vmatprep.subr.mxu0 0.0
  %70 = vmatpush1.msra.mxu0 %v30
  %71 = vmatprep.subr.mxu0 0.0
  %72 = vmatpush1.msra.mxu0 %v29
  %73 = vmatprep.subr.mxu0 0.0
  %74 = vmatpush1.msra.mxu0 %v28
  %75 = vmatprep.subr.mxu0 0.0
  %76 = vmatpush2.msra.mxu0 0.0
  %77 = vmatprep.subr.mxu0 0.0
  %78 = vmatpush2.msra.mxu0 0.0
  %79 = vmatprep.subr.mxu0 0.0
  %80 = vmatpush2.msra.mxu0 0.0
  %81 = vmatprep.subr.mxu0 0.0
  %82 = vmatpush2.msra.mxu0 0.0
  %83 = vmatprep.subr.mxu0 0.0
  %84 = vmatpush2.msra.mxu0 0.0
  %85 = vmatprep.subr.mxu0 0.0
  %86 = vmatpush2.msra.mxu0 0.0
  %87 = vmatprep.subr.mxu0 0.0
  %88 = vmatpush2.msra.mxu0 0.0
  %89 = vmatprep.subr.mxu0 0.0
  %90 = vmatpush2.msra.mxu0 0.0
  %91 = vmatprep.subr.mxu0 0.0
  %92 = vmatpush2.msra.mxu0 0.0
  %93 = vmatprep.subr.mxu0 0.0
  %94 = vmatpush2.msra.mxu0 0.0
  %95 = vmatprep.subr.mxu0 0.0
  %96 = vmatpush2.msra.mxu0 0.0
  %97 = vmatprep.subr.mxu0 0.0
  %98 = vmatpush2.msra.mxu0 0.0
  %99 = vmatprep.subr.mxu0 0.0
  %100 = vmatpush2.msra.mxu0 0.0
  %101 = vmatprep.subr.mxu0 0.0
  %102 = vmatpush2.msra.mxu0 0.0
  %103 = vmatprep.subr.mxu0 0.0
  %104 = vmatpush2.msra.mxu0 0.0
  %105 = vmatprep.subr.mxu0 0.0
  %106 = vmatpush2.msra.mxu0 0.0
  %107 = vmatprep.mubr.f32.mxu0 0.0
  %108 = vmatmul.mubr.f32.gmra.mxu0 %v41
  %v109 = vpop.f32.mrf.mxu0
  %v110 = vadd.f32 %v37, %v109
  %v111 = vpop.f32.mrf.mxu0
  %112 = vdwg.mxu0
  %v113 = vmax.f32 %v110, 0.0
  %v114 = vld [vmem:[%s4] sm:$0xff]
  %v115 = vld [vmem:[%s4 + $0x8] sm:$0xff]
  %v116 = vld [vmem:[%s4 + $0x10] sm:$0xff]
  %v117 = vld [vmem:[%s4 + $0x18] sm:$0xff]
  %v118 = vld [vmem:[%s4 + $0x20] sm:$0xff]
  %v119 = vld [vmem:[%s4 + $0x28] sm:$0xff]
  %v120 = vld [vmem:[%s4 + $0x30] sm:$0xff]
  %v121 = vld [vmem:[%s4 + $0x38] sm:$0xff]
  %v122 = vld [vmem:[%s4 + $0x40] sm:$0xff]
  %v123 = vld [vmem:[%s4 + $0x48] sm:$0xff]
  %v124 = vld [vmem:[%s4 + $0x50] sm:$0xff]
  %v125 = vld [vmem:[%s4 + $0x58] sm:$0xff]
  %v126 = vld [vmem:[%s4 + $0x60] sm:$0xf]
  %s127 = sld [smem:[#allocation2]]
  %v128 = vstv %s127
  %vm129 = vcmask 818176
  %v131 = vsel %vm129, %v113, 0
  %vm133 = vcmask 1043456
  %v135 = vsel %vm133, %v126, 0
  %137 = vmatprep.subr.mxu0 0.0
  %138 = vmatpush1.msra.mxu0 0.0
  %139 = vmatprep.subr.mxu0 0.0
  %140 = vmatpush1.msra.mxu0 0.0
  %141 = vmatprep.subr.mxu0 0.0
  %142 = vmatpush1.msra.mxu0 0.0
  %143 = vmatprep.subr.mxu0 0.0
  %144 = vmatpush1.msra.mxu0 %v135
  %145 = vmatprep.subr.mxu0 0.0
  %146 = vmatpush1.msra.mxu0 %v125
  %147 = vmatprep.subr.mxu0 0.0
  %148 = vmatpush1.msra.mxu0 %v124
  %149 = vmatprep.subr.mxu0 0.0
  %150 = vmatpush1.msra.mxu0 %v123
  %151 = vmatprep.subr.mxu0 0.0
  %152 = vmatpush1.msra.mxu0 %v122
  %153 = vmatprep.subr.mxu0 0.0
  %154 = vmatpush1.msra.mxu0 %v121
  %155 = vmatprep.subr.mxu0 0.0
  %156 = vmatpush1.msra.mxu0 %v120
  %157 = vmatprep.subr.mxu0 0.0
  %158 = vmatpush1.msra.mxu0 %v119
  %159 = vmatprep.subr.mxu0 0.0
  %160 = vmatpush1.msra.mxu0 %v118
  %161 = vmatprep.subr.mxu0 0.0
  %162 = vmatpush1.msra.mxu0 %v117
  %163 = vmatprep.subr.mxu0 0.0
  %164 = vmatpush1.msra.mxu0 %v116
  %165 = vmatprep.subr.mxu0 0.0
  %166 = vmatpush1.msra.mxu0 %v115
  %167 = vmatprep.subr.mxu0 0.0
  %168 = vmatpush1.msra.mxu0 %v114
  %169 = vmatprep.subr.mxu0 0.0
  %170 = vmatpush2.msra.mxu0 0.0
  %171 = vmatprep.subr.mxu0 0.0
  %172 = vmatpush2.msra.mxu0 0.0
  %173 = vmatprep.subr.mxu0 0.0
  %174 = vmatpush2.msra.mxu0 0.0
  %175 = vmatprep.subr.mxu0 0.0
  %176 = vmatpush2.msra.mxu0 0.0
  %177 = vmatprep.subr.mxu0 0.0
  %178 = vmatpush2.msra.mxu0 0.0
  %179 = vmatprep.subr.mxu0 0.0
  %180 = vmatpush2.msra.mxu0 0.0
  %181 = vmatprep.subr.mxu0 0.0
  %182 = vmatpush2.msra.mxu0 0.0
  %183 = vmatprep.subr.mxu0 0.0
  %184 = vmatpush2.msra.mxu0 0.0
  %185 = vmatprep.subr.mxu0 0.0
  %186 = vmatpush2.msra.mxu0 0.0
  %187 = vmatprep.subr.mxu0 0.0
  %188 = vmatpush2.msra.mxu0 0.0
  %189 = vmatprep.subr.mxu0 0.0
  %190 = vmatpush2.msra.mxu0 0.0
  %191 = vmatprep.subr.mxu0 0.0
  %192 = vmatpush2.msra.mxu0 0.0
  %193 = vmatprep.subr.mxu0 0.0
  %194 = vmatpush2.msra.mxu0 0.0
  %195 = vmatprep.subr.mxu0 0.0
  %196 = vmatpush2.msra.mxu0 0.0
  %197 = vmatprep.subr.mxu0 0.0
  %198 = vmatpush2.msra.mxu0 0.0
  %199 = vmatprep.subr.mxu0 0.0
  %200 = vmatpush2.msra.mxu0 0.0
  %201 = vmatprep.mubr.f32.mxu0 0.0
  %202 = vmatmul.mubr.f32.gmra.mxu0 %v131
  %v203 = vpop.f32.mrf.mxu0
  %v204 = vadd.f32 %v128, %v203
  %v205 = vpop.f32.mrf.mxu0
  %206 = vdwg.mxu0
  %v207 = vxor.u32 %v204, 2147483648
  %v208 = vmul.f32 %v207, 1.442695
  %v209 = vpow.pop %v208
  %v210 = vadd.f32 %v209, 1.0
  %v211 = vrcp.pop %v210
  %v212 = vmul.f32 1.0, %v211
  %vm213 = vcmask 7168
  %214 = vst.msk [vmem:[%s6] sm:$0xff] %vm213, %v212
  // Predicated region
  $region26: #{mlp_set.1} parent=0 // pred_check
    _
  $region27: #{mlp_set.1} parent=0 // pred_check_branch
    %216 = sbr.rel (0) target = $region29
  $region28: #{mlp_set.1} parent=0 // pred_region
    _
  $region29: #{mlp_set.1} parent=0 // pred_fallthru
    _
  // Predicated region
  $region30: #{mlp_set.1} parent=0 // pred_check
    _
  $region31: #{mlp_set.1} parent=0 // pred_check_branch
    %218 = sbr.rel (0) target = $region33
  $region32: #{mlp_set.1} parent=0 // pred_region
    _
  $region33: #{mlp_set.1} parent=0 // pred_fallthru
    _

</llo_original>
